<compile_context>
chip_gen: v6e
topology: v6e:2x2x1
jax: 0.10.0
libtpu: 0.0.40
codegen_flags: <defaults>
</compile_context>

<pallas_src>
import functools

import jax
import jax.numpy as jnp
from jax import lax
from jax.experimental import pallas as pl
from jax.experimental.pallas import tpu as pltpu

LANES = 128
GRANULE = 64                           # tile_rows is always a multiple of this
TARGET_BLOCK_BYTES = 2 * 1024 * 1024   # ~2 MiB input block per grid step
ACC_ROWS = 64                          # (64,128) f32 accumulator = 8 vregs


def _round_up(a, b):
    return (a + b - 1) // b * b


def _logsum_kernel(x_ref, o_ref, acc_ref, *, tile_rows, chunk_rows, n_rows,
                   n_blocks, n_full_blocks, dup_tail, scale, unroll):
    c = pl.program_id(0)               # TensorCore / partial index
    i = pl.program_id(1)               # reduction step over row blocks
    steps = pl.num_programs(1)
    blk = c * steps + i                # logical block index (may exceed
                                       # n_blocks-1 only on a duplicated tail)

    @pl.when(i == 0)
    def _init():
        acc_ref[...] = jnp.zeros_like(acc_ref)

    n_chunks = tile_rows // chunk_rows

    def _chunk_logs(k):
        start = pl.multiple_of(k * chunk_rows, chunk_rows)
        xs = x_ref[pl.ds(start, chunk_rows), :]
        return jnp.log(xs.astype(jnp.float32))        # EUP, (chunk_rows, LANES)

    def _full_body():                  # steady state: no masking at all
        def body(k, carry):
            logs = _chunk_logs(k)
            acc_ref[...] += logs.reshape(-1, ACC_ROWS, LANES).sum(axis=0)
            return carry
        lax.fori_loop(0, n_chunks, body, 0, unroll=unroll)

    def _partial_body():               # boundary block: mask by global row idx
        def body(k, carry):
            logs = _chunk_logs(k)
            row = lax.broadcasted_iota(jnp.int32, (chunk_rows, LANES), 0)
            grow = blk * tile_rows + k * chunk_rows + row
            # where-SELECT (not multiply): OOB rows can be log(garbage)=NaN/-inf.
            masked = jnp.where(grow < n_rows, logs, 0.0)
            acc_ref[...] += masked.reshape(-1, ACC_ROWS, LANES).sum(axis=0)
            return carry
        lax.fori_loop(0, n_chunks, body, 0, unroll=unroll)

    has_partial = n_full_blocks < n_blocks
    if n_full_blocks > 0:
        if has_partial or dup_tail:
            @pl.when(blk < n_full_blocks)
            def _():
                _full_body()
        else:
            _full_body()               # every step is a full block: unguarded
    if has_partial:
        cond = blk >= n_full_blocks
        if dup_tail:
            cond = jnp.logical_and(cond, blk < n_blocks)
        @pl.when(cond)
        def _():
            _partial_body()

    @pl.when(i == steps - 1)
    def _fini():
        # One cross-lane/sublane reduce per core; mean scale + negation folded in.
        total = jnp.sum(acc_ref[...]) * scale
        o_ref[...] = jnp.broadcast_to(total, (8, LANES))   # lane-dense store


def _tensorcores_per_chip():
    """2 on v7x-class chips (2 TensorCores per chip), else 1 (v5e / v6e)."""
    try:
        kind = jax.devices()[0].device_kind.lower()
    except Exception:
        return 1
    return 2 if ("v7" in kind or "tpu7" in kind) else 1


def log_loss(x, negation=True):
    """Pallas equivalent of LogLoss.forward: (-)mean(log(x)) over all elements."""
    n_elems = x.size
    scale = (-1.0 if negation else 1.0) / float(n_elems)

    flat = x.reshape(-1)                    # metadata-only for contiguous input
    n_rows = n_elems // LANES               # full 128-lane rows fed to the kernel
    tail = n_elems - n_rows * LANES         # <128 leftover elements

    # Ragged tail (and tiny inputs) handled with O(128) plain-JAX work — no
    # padded copy of the whole input.
    tail_sum = 0.0
    if tail or n_rows == 0:
        tail_sum = jnp.sum(jnp.log(flat[n_rows * LANES:].astype(jnp.float32)))
    if n_rows == 0:
        return tail_sum * scale

    x2d = flat[: n_rows * LANES].reshape(n_rows, LANES)   # native dtype, lane-dense

    # Byte-budgeted, dtype-aware tile: ~2 MiB, multiple of 64 rows.
    itemsize = x.dtype.itemsize
    budget_rows = max(
        GRANULE, (TARGET_BLOCK_BYTES // (LANES * itemsize)) // GRANULE * GRANULE)
    tile_rows = min(budget_rows, _round_up(n_rows, GRANULE))
    chunk_rows = next(c for c in (256, 128, 64) if tile_rows % c == 0)
    n_chunks = tile_rows // chunk_rows
    unroll = True if n_chunks <= 32 else 8

    n_blocks = pl.cdiv(n_rows, tile_rows)
    n_full_blocks = n_rows // tile_rows     # blocks where every row is valid

    def run(num_cores, core_parallel):
        steps = pl.cdiv(n_blocks, num_cores)
        dup_tail = num_cores * steps != n_blocks

        kernel = functools.partial(
            _logsum_kernel,
            tile_rows=tile_rows, chunk_rows=chunk_rows, n_rows=n_rows,
            n_blocks=n_blocks, n_full_blocks=n_full_blocks,
            dup_tail=dup_tail, scale=scale, unroll=unroll)

        if num_cores == 1:
            in_index_map = lambda c, i: (i, 0)
        else:
            # Clamp so a duplicated tail step never DMAs past the last block;
            # its contribution is skipped in-kernel via the blk < n_blocks guard.
            in_index_map = lambda c, i: (jnp.minimum(c * steps + i, n_blocks - 1), 0)

        if core_parallel:
            dim_sem = (pltpu.CORE_PARALLEL, pltpu.ARBITRARY)
        else:
            dim_sem = ("arbitrary", "arbitrary")

        out = pl.pallas_call(
            kernel,
            out_shape=jax.ShapeDtypeStruct((num_cores * 8, LANES), jnp.float32),
            grid_spec=pltpu.PrefetchScalarGridSpec(
                num_scalar_prefetch=0,
                grid=(num_cores, steps),
                in_specs=[pl.BlockSpec((tile_rows, LANES), in_index_map)],
                out_specs=pl.BlockSpec((8, LANES), lambda c, i: (c, 0)),
                scratch_shapes=[pltpu.VMEM((ACC_ROWS, LANES), jnp.float32)],
            ),
            compiler_params=pltpu.CompilerParams(
                dimension_semantics=dim_sem,
            ),
            cost_estimate=pl.CostEstimate(
                flops=n_rows * LANES,
                transcendentals=n_rows * LANES,
                bytes_accessed=n_rows * LANES * itemsize + num_cores * 8 * LANES * 4,
            ),
        )(x2d)
        return jnp.sum(out[0::8, 0])        # one scaled+negated partial per core

    if _tensorcores_per_chip() >= 2 and n_blocks >= 2:
        try:
            total = run(2, True)
        except Exception:
            # TODO(synk): fall back if CORE_PARALLEL lowering is unavailable here.
            total = run(1, False)
    else:
        total = run(1, False)

    return total + tail_sum * scale


if __name__ == "__main__":
    key = jax.random.PRNGKey(0)

    # Small NCHW-shaped input; values strictly positive so log() is finite.
    x = jax.random.uniform(
        key, (2, 4, 16, 16), dtype=jnp.float32, minval=0.1, maxval=1.0)
    out = jax.block_until_ready(log_loss(x, negation=True))
    ref = -jnp.mean(jnp.log(x))
    assert jnp.allclose(out, ref, rtol=1e-5, atol=1e-5), (out, ref)

    # Medium input exercising multi-block steady state, row-masked boundary
    # block, and the ragged (<128) tail handled in the wrapper.
    x2 = jax.random.uniform(
        jax.random.PRNGKey(1), (700001,), dtype=jnp.float32, minval=0.1, maxval=3.0)
    out2 = jax.block_until_ready(log_loss(x2, negation=True))
    ref2 = -jnp.mean(jnp.log(x2))
    assert jnp.allclose(out2, ref2, rtol=1e-4, atol=1e-5), (out2, ref2)

    print("KERNEL_OK")
</pallas_src>

<mosaic_0001>
module attributes {stable_mosaic.version = 11 : i64} {
  func.func @_logsum_kernel(%arg0: i32, %arg1: i32, %arg2: memref<64x128xf32, #tpu.memory_space<vmem>>, %arg3: memref<8x128xf32, #tpu.memory_space<vmem>>, %arg4: memref<64x128xf32, #tpu.memory_space<vmem>>) attributes {dimension_semantics = [#tpu.dimension_semantics<arbitrary>, #tpu.dimension_semantics<arbitrary>], iteration_bounds = array<i64: 1, 1>, scalar_prefetch = 0 : i64, scratch_operands = 1 : i64, tpu.core_type = #tpu.core_type<tc>, window_params = [{transform_indices = @transform_0, window_bounds = array<i64: 64, 128>}, {transform_indices = @transform_1, window_bounds = array<i64: 8, 128>}]} {
    %c1_i32 = arith.constant 1 : i32
    %0 = arith.muli %arg0, %c1_i32 : i32
    %1 = arith.addi %0, %arg1 : i32
    %c0_i32 = arith.constant 0 : i32
    %2 = arith.cmpi eq, %arg1, %c0_i32 : i32
    %3 = arith.extui %2 : i1 to i32
    %c0_i32_0 = arith.constant 0 : i32
    %4 = arith.cmpi ne, %3, %c0_i32_0 : i32
    scf.if %4 {
      %cst = arith.constant 0.000000e+00 : f32
      %11 = vector.broadcast %cst : f32 to vector<64x128xf32>
      %c0 = arith.constant 0 : index
      %c0_5 = arith.constant 0 : index
      %12 = vector.load %arg4[%c0, %c0_5] : memref<64x128xf32, #tpu.memory_space<vmem>>, vector<64x128xf32>
      tpu.vector_store %arg4[%c0, %c0_5], %11 {strides = array<i32>} : memref<64x128xf32, #tpu.memory_space<vmem>>, vector<64x128xf32>,
    } else {
    }
    %c0_i32_1 = arith.constant 0 : i32
    %5 = arith.cmpi sge, %1, %c0_i32_1 : i32
    %6 = arith.extui %5 : i1 to i32
    %c0_i32_2 = arith.constant 0 : i32
    %7 = arith.cmpi ne, %6, %c0_i32_2 : i32
    scf.if %7 {
      %c0_i32_5 = arith.constant 0 : i32
      %c64_i32 = arith.constant 64 : i32
      %11 = arith.muli %c0_i32_5, %c64_i32 : i32
      %12 = tpu.assume_multiple %11, 64 : i32
      %13 = arith.index_cast %12 : i32 to index
      %c0 = arith.constant 0 : index
      %14 = vector.load %arg2[%13, %c0] : memref<64x128xf32, #tpu.memory_space<vmem>>, vector<64x128xf32>
      %15 = math.log %14 : vector<64x128xf32>
      %16 = tpu.iota {dimensions = array<i32: 0>} : vector<64x128xi32>
      %c64_i32_6 = arith.constant 64 : i32
      %17 = arith.muli %1, %c64_i32_6 : i32
      %c64_i32_7 = arith.constant 64 : i32
      %18 = arith.muli %c0_i32_5, %c64_i32_7 : i32
      %19 = arith.addi %17, %18 : i32
      %20 = vector.broadcast %19 : i32 to vector<64x128xi32>
      %21 = arith.addi %20, %16 : vector<64x128xi32>
      %c16_i32 = arith.constant 16 : i32
      %22 = vector.broadcast %c16_i32 : i32 to vector<64x128xi32>
      %23 = arith.cmpi slt, %21, %22 : vector<64x128xi32>
      %cst = arith.constant 0.000000e+00 : f32
      %24 = vector.broadcast %cst : f32 to vector<64x128xf32>
      %25 = arith.select %23, %15, %24 : vector<64x128xi1>, vector<64x128xf32>
      %c0_8 = arith.constant 0 : index
      %c0_9 = arith.constant 0 : index
      %26 = vector.load %arg4[%c0_8, %c0_9] : memref<64x128xf32, #tpu.memory_space<vmem>>, vector<64x128xf32>
      %27 = vector.shape_cast %25 : vector<64x128xf32> to vector<1x64x128xf32>
      %cst_10 = arith.constant dense<0.000000e+00> : vector<64x128xf32>
      %28 = vector.multi_reduction <add>, %27, %cst_10 [0] : vector<1x64x128xf32> to vector<64x128xf32>
      %29 = arith.addf %26, %28 : vector<64x128xf32>
      %c0_11 = arith.constant 0 : index
      %c0_12 = arith.constant 0 : index
      %30 = vector.load %arg4[%c0_11, %c0_12] : memref<64x128xf32, #tpu.memory_space<vmem>>, vector<64x128xf32>
      tpu.vector_store %arg4[%c0_11, %c0_12], %29 {strides = array<i32>} : memref<64x128xf32, #tpu.memory_space<vmem>>, vector<64x128xf32>,
      %c1_i32_13 = arith.constant 1 : i32
    } else {
    }
    %c0_i32_3 = arith.constant 0 : i32
    %8 = arith.cmpi eq, %arg1, %c0_i32_3 : i32
    %9 = arith.extui %8 : i1 to i32
    %c0_i32_4 = arith.constant 0 : i32
    %10 = arith.cmpi ne, %9, %c0_i32_4 : i32
    scf.if %10 {
      %c0 = arith.constant 0 : index
      %c0_5 = arith.constant 0 : index
      %11 = vector.load %arg4[%c0, %c0_5] : memref<64x128xf32, #tpu.memory_space<vmem>>, vector<64x128xf32>
      %12 = vector.shape_cast %11 : vector<64x128xf32> to vector<1x64x128xf32>
      %cst = arith.constant dense<0.000000e+00> : vector<1xf32>
      %13 = vector.multi_reduction <add>, %12, %cst [1, 2] : vector<1x64x128xf32> to vector<1xf32>
      %14 = vector.shape_cast %13 : vector<1xf32> to vector<1x1x1xf32>
      %15 = vector.extract %14[0, 0, 0] : f32 from vector<1x1x1xf32>
      %cst_6 = arith.constant -4.8828125E-4 : f32
      %16 = arith.mulf %15, %cst_6 : f32
      %17 = vector.broadcast %16 : f32 to vector<8x128xf32>
      %c0_7 = arith.constant 0 : index
      %c0_8 = arith.constant 0 : index
      %18 = vector.load %arg3[%c0_7, %c0_8] : memref<8x128xf32, #tpu.memory_space<vmem>>, vector<8x128xf32>
      tpu.vector_store %arg3[%c0_7, %c0_8], %17 {strides = array<i32>} : memref<8x128xf32, #tpu.memory_space<vmem>>, vector<8x128xf32>,
    } else {
    }
    return
  }
  func.func @transform_0(%arg0: i32, %arg1: i32) -> (i32, i32) {
    %c0_i32 = arith.constant 0 : i32
    %c0_i32_0 = arith.constant 0 : i32
    return %arg1, %c0_i32 : i32, i32
  }
  func.func @transform_1(%arg0: i32, %arg1: i32) -> (i32, i32) {
    %c0_i32 = arith.constant 0 : i32
    %c0_i32_0 = arith.constant 0 : i32
    return %arg0, %c0_i32 : i32, i32
  }
}

</mosaic_0001>

<llo_original>
// kernel: tpu_custom_call.1
$region0: #{tpu_custom_call.1}
  #allocation0 [shape = 'u32[]', space=smem, size = 0x4, offset = 0x4, fixed_abs, tag = 'smem constant byte address 0x4 - core index']
  #allocation1 [shape = 'u32[144,128]{1,0:T(1,128)}', space=vmem, size = 0x12000, scoped, tag = 'internal scratch']
  #allocation2 [shape = 'f32[64,128]{1,0:T(8,128)}', space=vmem, size = 0x8000, scoped, tag = 'scratch operand']
  %s0 = inlined_call_operand.hbm [shape: f32[16,128], index: 0, kind: input, shape index: {}]
  %s1 = inlined_call_operand.hbm [shape: f32[8,128], index: 1, kind: output, shape index: {}]
  %s2 = sld [smem:[#allocation0]]
  $region30: #{tpu_custom_call.1} parent=0
    _
  %s4 = ssub.s32 1, %s2
  %s5 = scalar_select 0, %s4, %s2
  $region1: #{tpu_custom_call.1} parent=0
    #allocation3 [shape = 'u8[32768]{0}', space=vmem, size = 0x8000, scoped, tag = 'input window, operand 0, single buffered']
    #allocation4 [shape = 's32[1]{0}', space=sflag, size = 0x4, scoped, tag = 'scoped memory for tpu_custom_call.1']
    #allocation5 [shape = 's32[1]{0}', space=sflag, size = 0x4, scoped, tag = 'scoped memory for tpu_custom_call.1']
    #allocation6 [shape = 'u8[4096]{0}', space=vmem, size = 0x1000, scoped, tag = 'output window, operand 0, single buffered']
    %6 = vsyncpa [#allocation4], 0
    %7 = vsyncpa [#allocation5], 0
    // Predicated region
    $region2: #{tpu_custom_call.1} parent=1 // pred_check
      _
    $region3: #{tpu_custom_call.1} parent=1 // pred_check_branch
      %9 = sbr.rel (0) target = $region5
    $region4: #{tpu_custom_call.1} parent=1 // pred_region
      %s11 = ssub.s32 1024, 256
      %12 = vsyncadd [#allocation4], %s11
      %s13 = sshll.u32 [#allocation3], 4
      %s14 = int_to_ptr.vmem [resolvable:$true] %s13
      %19 = dma.hbm_to_vmem [thread:$0]  %s0, 256, %s14, [#allocation4], 128, 128, 8
    $region5: #{tpu_custom_call.1} parent=1 // pred_fallthru
      _
    // Predicated region
    $region6: #{tpu_custom_call.1} parent=1 // pred_check
      _
    $region7: #{tpu_custom_call.1} parent=1 // pred_check_branch
      %21 = sbr.rel (0) target = $region9
    $region8: #{tpu_custom_call.1} parent=1 // pred_region
      %22 = dma.done [#allocation4], 1024
    $region9: #{tpu_custom_call.1} parent=1 // pred_fallthru
      _
    %s23 = sadd.s32 0, 0
    %p24 = scmp.eq.s32.totalorder 0, 0
    // Predicated region
    $region10: #{tpu_custom_call.1} parent=1 // pred_check
      %p25 = pneg %p24
    $region11: #{tpu_custom_call.1} parent=1 // pred_check_branch
      %27 = sbr.rel (%p25) target = $region13
    $region12: #{tpu_custom_call.1} parent=1 // pred_region
      %28 = vst [vmem:[#allocation2] sm:$0xff] 0.0
      %29 = vst [vmem:[#allocation2 + $0x8] sm:$0xff] 0.0
      %30 = vst [vmem:[#allocation2 + $0x10] sm:$0xff] 0.0
      %31 = vst [vmem:[#allocation2 + $0x18] sm:$0xff] 0.0
      %32 = vst [vmem:[#allocation2 + $0x20] sm:$0xff] 0.0
      %33 = vst [vmem:[#allocation2 + $0x28] sm:$0xff] 0.0
      %34 = vst [vmem:[#allocation2 + $0x30] sm:$0xff] 0.0
      %35 = vst [vmem:[#allocation2 + $0x38] sm:$0xff] 0.0
    $region13: #{tpu_custom_call.1} parent=1 // pred_fallthru
      _
    %p36 = scmp.ge.s32.totalorder %s23, 0
    // Predicated region
    $region14: #{tpu_custom_call.1} parent=1 // pred_check
      %p37 = pneg %p36
    $region15: #{tpu_custom_call.1} parent=1 // pred_check_branch
      %39 = sbr.rel (%p37) target = $region17
    $region16: #{tpu_custom_call.1} parent=1 // pred_region
      %v40 = vld [vmem:[#allocation3] sm:$0xff]
      %v41 = vld [vmem:[#allocation3 + $0x8] sm:$0xff]
      %v42 = vld [vmem:[#allocation3 + $0x10] sm:$0xff]
      %v43 = vld [vmem:[#allocation3 + $0x18] sm:$0xff]
      %v44 = vld [vmem:[#allocation3 + $0x20] sm:$0xff]
      %v45 = vld [vmem:[#allocation3 + $0x28] sm:$0xff]
      %v46 = vld [vmem:[#allocation3 + $0x30] sm:$0xff]
      %v47 = vld [vmem:[#allocation3 + $0x38] sm:$0xff]
      %v48 = vlog2.pop %v40
      %v49 = vmul.f32 %v48, 0.6931472
      %v50 = vlog2.pop %v41
      %v51 = vmul.f32 %v50, 0.6931472
      %v52 = vlog2.pop %v42
      %v53 = vmul.f32 %v52, 0.6931472
      %v54 = vlog2.pop %v43
      %v55 = vmul.f32 %v54, 0.6931472
      %v56 = vlog2.pop %v44
      %v57 = vmul.f32 %v56, 0.6931472
      %v58 = vlog2.pop %v45
      %v59 = vmul.f32 %v58, 0.6931472
      %v60 = vlog2.pop %v46
      %v61 = vmul.f32 %v60, 0.6931472
      %v62 = vlog2.pop %v47
      %v63 = vmul.f32 %v62, 0.6931472
      %v64 = vlaneseq
      %v65 = vshrl.u32 %v64, 7
      %v66 = vadd.s32 %v65, 8
      %v67 = vadd.s32 %v65, 16
      %v68 = vadd.s32 %v65, 24
      %v69 = vadd.s32 %v65, 32
      %v70 = vadd.s32 %v65, 40
      %v71 = vadd.s32 %v65, 48
      %v72 = vadd.s32 %v65, 56
      %s73 = smul.u32 %s23, 64
      %v74 = vstv %s73
      %v75 = vadd.s32 %v74, %v65
      %v76 = vadd.s32 %v74, %v66
      %v77 = vadd.s32 %v74, %v67
      %v78 = vadd.s32 %v74, %v68
      %v79 = vadd.s32 %v74, %v69
      %v80 = vadd.s32 %v74, %v70
      %v81 = vadd.s32 %v74, %v71
      %v82 = vadd.s32 %v74, %v72
      %vm83 = vcmp.lt.s32.totalorder %v75, 16
      %vm84 = vcmp.lt.s32.totalorder %v76, 16
      %vm85 = vcmp.lt.s32.totalorder %v77, 16
      %vm86 = vcmp.lt.s32.totalorder %v78, 16
      %vm87 = vcmp.lt.s32.totalorder %v79, 16
      %vm88 = vcmp.lt.s32.totalorder %v80, 16
      %vm89 = vcmp.lt.s32.totalorder %v81, 16
      %vm90 = vcmp.lt.s32.totalorder %v82, 16
      %v91 = vsel %vm83, %v49, 0.0
      %v92 = vsel %vm84, %v51, 0.0
      %v93 = vsel %vm85, %v53, 0.0
      %v94 = vsel %vm86, %v55, 0.0
      %v95 = vsel %vm87, %v57, 0.0
      %v96 = vsel %vm88, %v59, 0.0
      %v97 = vsel %vm89, %v61, 0.0
      %v98 = vsel %vm90, %v63, 0.0
      %v99 = vld [vmem:[#allocation2] sm:$0xff]
      %v100 = vld [vmem:[#allocation2 + $0x8] sm:$0xff]
      %v101 = vld [vmem:[#allocation2 + $0x10] sm:$0xff]
      %v102 = vld [vmem:[#allocation2 + $0x18] sm:$0xff]
      %v103 = vld [vmem:[#allocation2 + $0x20] sm:$0xff]
      %v104 = vld [vmem:[#allocation2 + $0x28] sm:$0xff]
      %v105 = vld [vmem:[#allocation2 + $0x30] sm:$0xff]
      %v106 = vld [vmem:[#allocation2 + $0x38] sm:$0xff]
      %v107 = vadd.f32 %v91, 0.0
      %v108 = vadd.f32 %v92, 0.0
      %v109 = vadd.f32 %v93, 0.0
      %v110 = vadd.f32 %v94, 0.0
      %v111 = vadd.f32 %v95, 0.0
      %v112 = vadd.f32 %v96, 0.0
      %v113 = vadd.f32 %v97, 0.0
      %v114 = vadd.f32 %v98, 0.0
      %v115 = vadd.f32 %v99, %v107
      %v116 = vadd.f32 %v100, %v108
      %v117 = vadd.f32 %v101, %v109
      %v118 = vadd.f32 %v102, %v110
      %v119 = vadd.f32 %v103, %v111
      %v120 = vadd.f32 %v104, %v112
      %v121 = vadd.f32 %v105, %v113
      %v122 = vadd.f32 %v106, %v114
      %123 = vst [vmem:[#allocation2] sm:$0xff] %v115
      %124 = vst [vmem:[#allocation2 + $0x8] sm:$0xff] %v116
      %125 = vst [vmem:[#allocation2 + $0x10] sm:$0xff] %v117
      %126 = vst [vmem:[#allocation2 + $0x18] sm:$0xff] %v118
      %127 = vst [vmem:[#allocation2 + $0x20] sm:$0xff] %v119
      %128 = vst [vmem:[#allocation2 + $0x28] sm:$0xff] %v120
      %129 = vst [vmem:[#allocation2 + $0x30] sm:$0xff] %v121
      %130 = vst [vmem:[#allocation2 + $0x38] sm:$0xff] %v122
    $region17: #{tpu_custom_call.1} parent=1 // pred_fallthru
      _
    // Predicated region
    $region18: #{tpu_custom_call.1} parent=1 // pred_check
      %p131 = pneg %p24
    $region19: #{tpu_custom_call.1} parent=1 // pred_check_branch
      %133 = sbr.rel (%p131) target = $region21
    $region20: #{tpu_custom_call.1} parent=1 // pred_region
      %v134 = vld [vmem:[#allocation2] sm:$0xff]
      %v135 = vld [vmem:[#allocation2 + $0x8] sm:$0xff]
      %v136 = vld [vmem:[#allocation2 + $0x10] sm:$0xff]
      %v137 = vld [vmem:[#allocation2 + $0x18] sm:$0xff]
      %v138 = vld [vmem:[#allocation2 + $0x20] sm:$0xff]
      %v139 = vld [vmem:[#allocation2 + $0x28] sm:$0xff]
      %v140 = vld [vmem:[#allocation2 + $0x30] sm:$0xff]
      %v141 = vld [vmem:[#allocation2 + $0x38] sm:$0xff]
      %v142 = vadd.f32 %v134, %v135
      %v143 = vadd.f32 %v142, %v136
      %v144 = vadd.f32 %v143, %v137
      %v145 = vadd.f32 %v144, %v138
      %v146 = vadd.f32 %v145, %v139
      %v147 = vadd.f32 %v146, %v140
      %v148 = vadd.f32 %v147, %v141
      %149 = vadd.xlane.f32.xlu0 %v148
      %v150 = vpop.xlane.xlu0 %149
      %v151 = vrot.slane %v150, 4
      %v152 = vadd.f32 %v150, %v151
      %v153 = vrot.slane %v152, 2
      %v154 = vadd.f32 %v152, %v153
      %v155 = vrot.slane %v154, 1
      %v156 = vadd.f32 %v154, %v155
      %s157 = vtos %v156
      %s158 = smul.f32 %s157, -0.00048828125
      %v159 = vstv %s158
      %160 = vst [vmem:[#allocation6] sm:$0xff] %v159
    $region21: #{tpu_custom_call.1} parent=1 // pred_fallthru
      _
    // Predicated region
    $region22: #{tpu_custom_call.1} parent=1 // pred_check
      _
    $region23: #{tpu_custom_call.1} parent=1 // pred_check_branch
      %162 = sbr.rel (0) target = $region25
    $region24: #{tpu_custom_call.1} parent=1 // pred_region
      %s164 = ssub.s32 128, 128
      %165 = vsyncadd [#allocation5], %s164
      %s167 = sshll.u32 [#allocation6], 4
      %s168 = int_to_ptr.vmem [resolvable:$true] %s167
      %170 = dma.vmem_to_hbm [thread:$0]  %s168, 128, %s1, [#allocation5]
    $region25: #{tpu_custom_call.1} parent=1 // pred_fallthru
      _
    // Predicated region
    $region26: #{tpu_custom_call.1} parent=1 // pred_check
      _
    $region27: #{tpu_custom_call.1} parent=1 // pred_check_branch
      %172 = sbr.rel (0) target = $region29
    $region28: #{tpu_custom_call.1} parent=1 // pred_region
      %173 = dma.done [#allocation5], 128
    $region29: #{tpu_custom_call.1} parent=1 // pred_fallthru
      _
    %174 = vsyncpa [#allocation4], 1
    %175 = vsyncpa [#allocation5], 1

</llo_original>
